<compile_context>
chip_gen: v6e
topology: v6e:2x2x1
jax: 0.10.0
libtpu: 0.0.40
codegen_flags: <defaults>
</compile_context>

<pallas_src>
import jax
import jax.numpy as jnp
from jax.experimental import pallas as pl
from jax.experimental.pallas import tpu as pltpu

_LANE = 128
_ROW_PACK = 32                    # rows multiple of 32 keeps f32/bf16/int8 vregs packed
_ELEM_PACK = 8 * _LANE            # 1-D block granularity (1024 elems)
_MIN_BLOCK_BYTES = 4 << 20        # never smaller than 4 MiB per buffer
_MAX_BLOCK_BYTES = 16 << 20       # never larger than 16 MiB per buffer


def _relu6_kernel(x_ref, o_ref):
    x = x_ref[...]
    # relu6(x) = min(max(x, 0), 6); weakly-typed 0/6 preserve the input dtype.
    o_ref[...] = jnp.minimum(jnp.maximum(x, 0), 6)


def _chip_profile():
    """Return (vmem_capacity_bytes, tensorcores_per_chip) with safe fallbacks."""
    vmem_bytes = 64 << 20          # conservative: v7x has the smallest VMEM
    n_cores = 1
    try:
        info = pltpu.get_tpu_info()
        vmem_bytes = int(getattr(info, "vmem_capacity_bytes", vmem_bytes))
    except Exception:
        pass
    try:
        kind = jax.devices()[0].device_kind.lower()
        # v7x-class chips have 2 TensorCores sharing HBM (megacore sharding of
        # the "parallel" grid axis).  v5e / v6e are single-TC.
        if ("v7" in kind) or ("tpu7" in kind) or ("7x" in kind):
            n_cores = 2
    except Exception:
        pass
    return vmem_bytes, n_cores


def _target_block_bytes(vmem_bytes):
    return int(min(_MAX_BLOCK_BYTES, max(_MIN_BLOCK_BYTES, vmem_bytes // 6)))


def _vmem_limit(block_bytes_actual, vmem_bytes):
    """Derive vmem_limit_bytes from the actual pipeline footprint + slack."""
    want = 4 * int(block_bytes_actual) + (8 << 20)   # 2 in + 2 out buffers + slack
    cap = int(vmem_bytes * 0.8)                      # headroom vs physical VMEM
    return max(32 << 20, min(want, cap))


def _choose_block_rows(rows, itemsize, block_bytes, n_cores):
    """Rows per block: as big as the VMEM budget allows; multiple of 32.

    On megacore chips the step count is rounded up to a multiple of the core
    count with near-equal blocks so both TensorCores get balanced work.  On
    single-TC chips we never shrink blocks just to add grid steps.
    """
    row_bytes = _LANE * itemsize
    br = max((block_bytes // row_bytes) // _ROW_PACK * _ROW_PACK, _ROW_PACK)
    if n_cores > 1:
        steps = max(pl.cdiv(rows, br), 1)
        steps = pl.cdiv(steps, n_cores) * n_cores
        br = pl.cdiv(pl.cdiv(rows, steps), _ROW_PACK) * _ROW_PACK
    return min(max(br, _ROW_PACK), rows)   # == rows (full extent) or multiple of 32


def _relu6_2d(x2d, block_bytes, vmem_bytes, n_cores):
    """Lane-dense path for element counts that are multiples of 128."""
    rows, lane = x2d.shape
    itemsize = x2d.dtype.itemsize
    block_rows = _choose_block_rows(rows, itemsize, block_bytes, n_cores)
    grid = (pl.cdiv(rows, block_rows),)    # ragged last block handled by Pallas
    block_actual = block_rows * lane * itemsize
    return pl.pallas_call(
        _relu6_kernel,
        out_shape=jax.ShapeDtypeStruct((rows, lane), x2d.dtype),
        grid=grid,
        in_specs=[pl.BlockSpec((block_rows, lane), lambda i: (i, 0))],
        out_specs=pl.BlockSpec((block_rows, lane), lambda i: (i, 0)),
        compiler_params=pltpu.CompilerParams(
            dimension_semantics=("parallel",),
            vmem_limit_bytes=_vmem_limit(block_actual, vmem_bytes),
        ),
        cost_estimate=pl.CostEstimate(
            flops=2 * rows * lane,
            transcendentals=0,
            bytes_accessed=2 * rows * lane * itemsize,
        ),
    )(x2d)


def _relu6_1d(x_flat, block_bytes, vmem_bytes):
    """No-pad path for element counts that are NOT multiples of 128.

    The flat vector is processed directly; the ragged last block (or the full
    extent for small vectors) is masked by Pallas, so there is no host-side
    pad of the input nor slice of the output.
    """
    n = x_flat.size
    itemsize = x_flat.dtype.itemsize
    block_elems = max((block_bytes // itemsize) // _ELEM_PACK * _ELEM_PACK,
                      _ELEM_PACK)
    if block_elems >= n:
        # Single block covering the full (unaligned) extent — always legal.
        return pl.pallas_call(
            _relu6_kernel,
            out_shape=jax.ShapeDtypeStruct((n,), x_flat.dtype),
            compiler_params=pltpu.CompilerParams(
                vmem_limit_bytes=_vmem_limit(n * itemsize, vmem_bytes),
            ),
        )(x_flat)
    grid = (pl.cdiv(n, block_elems),)      # ragged last block masked by Pallas
    return pl.pallas_call(
        _relu6_kernel,
        out_shape=jax.ShapeDtypeStruct((n,), x_flat.dtype),
        grid=grid,
        in_specs=[pl.BlockSpec((block_elems,), lambda i: (i,))],
        out_specs=pl.BlockSpec((block_elems,), lambda i: (i,)),
        compiler_params=pltpu.CompilerParams(
            dimension_semantics=("parallel",),
            vmem_limit_bytes=_vmem_limit(block_elems * itemsize, vmem_bytes),
        ),
        cost_estimate=pl.CostEstimate(
            flops=2 * n,
            transcendentals=0,
            bytes_accessed=2 * n * itemsize,
        ),
    )(x_flat)


def relu6_pallas(x):
    """Elementwise relu6 via Pallas. Accepts any shape / any real dtype."""
    orig_shape = x.shape
    n = x.size
    if n == 0:
        return x

    vmem_bytes, n_cores = _chip_profile()
    block_bytes = _target_block_bytes(vmem_bytes)

    x_flat = jnp.ravel(x)
    if n % _LANE == 0:
        rows = n // _LANE
        out_flat = _relu6_2d(x_flat.reshape(rows, _LANE),
                             block_bytes, vmem_bytes, n_cores).reshape(-1)
    else:
        out_flat = _relu6_1d(x_flat, block_bytes, vmem_bytes)
    return out_flat.reshape(orig_shape)


if __name__ == "__main__":
    key = jax.random.PRNGKey(0)
    k1, k2 = jax.random.split(key)

    relu6 = jax.jit(relu6_pallas)

    # Primary test: NCHW activation map (lane-aligned fast path); values spread
    # beyond [0, 6] so both clamps are exercised.
    x = jax.random.normal(k1, (2, 4, 16, 16), dtype=jnp.float32) * 5.0
    y = jax.block_until_ready(relu6(x))
    y_ref = jnp.clip(x, 0.0, 6.0)
    assert y.shape == x.shape and y.dtype == x.dtype
    assert jnp.array_equal(y, y_ref), "aligned-path mismatch vs reference"

    # Secondary test: element count not a multiple of 128 → no-pad 1-D path.
    x2 = jax.random.normal(k2, (5, 77), dtype=jnp.float32) * 5.0
    y2 = jax.block_until_ready(relu6(x2))
    assert jnp.array_equal(y2, jnp.clip(x2, 0.0, 6.0)), "unaligned-path mismatch"

    print("KERNEL_OK")
</pallas_src>

<mosaic_0001>
module attributes {stable_mosaic.version = 11 : i64} {
  func.func @_relu6_kernel(%arg0: i32, %arg1: memref<16x128xf32, #tpu.memory_space<vmem>>, %arg2: memref<16x128xf32, #tpu.memory_space<vmem>>) attributes {dimension_semantics = [#tpu.dimension_semantics<parallel>], iteration_bounds = array<i64: 1>, scalar_prefetch = 0 : i64, scratch_operands = 0 : i64, tpu.core_type = #tpu.core_type<tc>, window_params = [{transform_indices = @transform_0, window_bounds = array<i64: 16, 128>}, {transform_indices = @transform_1, window_bounds = array<i64: 16, 128>}]} {
    %c0 = arith.constant 0 : index
    %c0_0 = arith.constant 0 : index
    %0 = vector.load %arg1[%c0, %c0_0] : memref<16x128xf32, #tpu.memory_space<vmem>>, vector<16x128xf32>
    %cst = arith.constant 0.000000e+00 : f32
    %1 = vector.broadcast %cst : f32 to vector<16x128xf32>
    %2 = arith.maximumf %0, %1 : vector<16x128xf32>
    %cst_1 = arith.constant 6.000000e+00 : f32
    %3 = vector.broadcast %cst_1 : f32 to vector<16x128xf32>
    %4 = arith.minimumf %2, %3 : vector<16x128xf32>
    %c0_2 = arith.constant 0 : index
    %c0_3 = arith.constant 0 : index
    %5 = vector.load %arg2[%c0_2, %c0_3] : memref<16x128xf32, #tpu.memory_space<vmem>>, vector<16x128xf32>
    tpu.vector_store %arg2[%c0_2, %c0_3], %4 {strides = array<i32>} : memref<16x128xf32, #tpu.memory_space<vmem>>, vector<16x128xf32>,
    return
  }
  func.func @transform_0(%arg0: i32) -> (i32, i32) {
    %c0_i32 = arith.constant 0 : i32
    %c0_i32_0 = arith.constant 0 : i32
    return %arg0, %c0_i32 : i32, i32
  }
  func.func @transform_1(%arg0: i32) -> (i32, i32) {
    %c0_i32 = arith.constant 0 : i32
    %c0_i32_0 = arith.constant 0 : i32
    return %arg0, %c0_i32 : i32, i32
  }
}

</mosaic_0001>

<llo_original>
// kernel: relu6_pallas.1
$region0: #{relu6_pallas.1}
  #allocation0 [shape = 'u32[]', space=smem, size = 0x4, offset = 0x4, fixed_abs, tag = 'smem constant byte address 0x4 - core index']
  #allocation1 [shape = 'u32[144,128]{1,0:T(1,128)}', space=vmem, size = 0x12000, scoped, tag = 'internal scratch']
  %s0 = inlined_call_operand.vmem [shape: f32[16,128], index: 0, kind: input, shape index: {}]
  %s1 = inlined_call_operand.vmem [shape: f32[16,128], index: 1, kind: output, shape index: {}]
  %s2 = sld [smem:[#allocation0]]
  $region14: #{relu6_pallas.1} parent=0
    _
  %s4 = ssub.s32 1, %s2
  %s5 = scalar_select 0, %s4, %s2
  // Predicated region
  $region2: #{relu6_pallas.1} parent=0 // pred_check
    _
  $region3: #{relu6_pallas.1} parent=0 // pred_check_branch
    %7 = sbr.rel (0) target = $region5
  $region4: #{relu6_pallas.1} parent=0 // pred_region
    _
  $region5: #{relu6_pallas.1} parent=0 // pred_fallthru
    _
  %v8 = vld [vmem:[%s0] sm:$0xff]
  %v9 = vld [vmem:[%s0 + $0x8] sm:$0xff]
  %v10 = vmax.f32 %v8, 0.0
  %v11 = vmax.f32 %v9, 0.0
  %v12 = vmin.f32 %v10, 6.0
  %v13 = vmin.f32 %v11, 6.0
  %14 = vst [vmem:[%s1] sm:$0xff] %v12
  %15 = vst [vmem:[%s1 + $0x8] sm:$0xff] %v13
  // Predicated region
  $region6: #{relu6_pallas.1} parent=0 // pred_check
    _
  $region7: #{relu6_pallas.1} parent=0 // pred_check_branch
    %17 = sbr.rel (0) target = $region9
  $region8: #{relu6_pallas.1} parent=0 // pred_region
    _
  $region9: #{relu6_pallas.1} parent=0 // pred_fallthru
    _
  // Predicated region
  $region10: #{relu6_pallas.1} parent=0 // pred_check
    _
  $region11: #{relu6_pallas.1} parent=0 // pred_check_branch
    %19 = sbr.rel (0) target = $region13
  $region12: #{relu6_pallas.1} parent=0 // pred_region
    _
  $region13: #{relu6_pallas.1} parent=0 // pred_fallthru
    _

</llo_original>
